<compile_context>
chip_gen: v7x
topology: tpu7x:2x2x1
jax: 0.10.0
libtpu: 0.0.40
codegen_flags: <defaults>
</compile_context>

<pallas_src>
import functools

import jax
import jax.numpy as jnp
from jax.experimental import pallas as pl
from jax.experimental.pallas import tpu as pltpu


_LANE = 128


def _round_up(n, m):
    return ((n + m - 1) // m) * m


def _qmoe_kernel(x_ref, o_ref, *, maxq, sym):
    """Per-row-tile: find_params (row min/max -> scale, zero) then quantize."""
    x = x_ref[...]  # storage dtype; min/max are exact in bf16/int8

    # --- find_params: row-wise min/max clamped against 0 -------------------
    xmin = jnp.minimum(jnp.min(x, axis=-1, keepdims=True).astype(jnp.float32), 0.0)
    xmax = jnp.maximum(jnp.max(x, axis=-1, keepdims=True).astype(jnp.float32), 0.0)

    if sym:
        xmax = jnp.maximum(jnp.abs(xmin), xmax)
        xmin = jnp.where(xmin < 0, -xmax, xmin)

    both_zero = jnp.logical_and(xmin == 0.0, xmax == 0.0)
    xmin = jnp.where(both_zero, -1.0, xmin)
    xmax = jnp.where(both_zero, 1.0, xmax)

    if maxq < 0:
        # Ternary quantization path (bits == 1.5).
        scale = xmax
        zero = xmin  # original QMoE convention; reference leaves it unset (bug)
        xf = x.astype(jnp.float32)
        o_ref[...] = jnp.where(
            xf > 0.5 * scale, scale,
            jnp.where(xf < 0.5 * zero, zero, 0.0)).astype(o_ref.dtype)
    else:
        # scale is (TR,1): exact reciprocal once per row, then a single
        # full-tile multiply on the hot path (no per-element divide).
        scale = (xmax - xmin) * (1.0 / float(maxq))              # (TR, 1), > 0
        inv_scale = pl.reciprocal(scale, approx=False)           # (TR, 1)
        if sym:
            zero_c = (maxq + 1) / 2
            lo = -float(zero_c)                                   # scalar bounds
            hi = float(maxq) - float(zero_c)
        else:
            zero = jnp.round(-xmin * inv_scale)                   # (TR, 1)
            lo = -zero
            hi = float(maxq) - zero
        # Folded form of: q = clip(round(x/scale)+zero, 0, maxq); out = scale*(q-zero)
        r = jnp.round(x.astype(jnp.float32) * inv_scale)
        o_ref[...] = (scale * jnp.clip(r, lo, hi)).astype(o_ref.dtype)


def qmoe_quantizer_forward(x, *, bits=8, sym=False, tile_rows=None):
    """Fused find_params + quantize forward pass (post-calibration forward)."""
    assert x.ndim == 2, "layout: (rows, cols); reductions over last axis"
    R, C = x.shape
    itemsize = jnp.dtype(x.dtype).itemsize
    sublane = max(8, 32 // itemsize)          # f32 -> 8, bf16 -> 16, i8 -> 32

    # Rows padded only when R is not a sublane multiple (columns never padded:
    # the block's last dim is the full extent C, which is always legal).
    Rp = _round_up(R, sublane)
    xp = jnp.pad(x, ((0, Rp - R), (0, 0))) if Rp != R else x

    # VMEM footprint estimate uses the lane-padded column count.
    c_lanes = _round_up(C, _LANE)

    # Generation-aware tile / VMEM budget.
    try:
        vmem_cap = int(pltpu.get_tpu_info().vmem_capacity_bytes)
    except Exception:
        vmem_cap = 64 << 20
    if vmem_cap >= (100 << 20):               # v5e / v6e: 128 MiB VMEM
        target_bytes, limit_cap = 8 << 20, 96 << 20
    else:                                     # v7x: 64 MiB VMEM
        target_bytes, limit_cap = 4 << 20, 48 << 20

    if tile_rows is None:
        tile_rows = (target_bytes // (c_lanes * itemsize)) // sublane * sublane
    tile_rows = int(tile_rows)
    if tile_rows <= 0:
        tile_rows = sublane
    # TODO(synk): degenerate wide-row case (one sublane x C strip over budget)
    # would be better served by a 2-D grid with a column-reduction pass.
    tile_rows = _round_up(tile_rows, sublane)
    tile_rows = min(tile_rows, Rp)
    # Guarantee >= 4 grid steps when R allows (megacore sharding on v7x and
    # DMA/compute overlap on all generations).
    if Rp >= 4 * sublane:
        cap4 = max(sublane, (Rp // 4) // sublane * sublane)
        tile_rows = min(tile_rows, cap4)

    grid = pl.cdiv(Rp, tile_rows)

    maxq = -1 if bits == 1.5 else (2 ** int(bits) - 1)
    kernel = functools.partial(_qmoe_kernel, maxq=maxq, sym=sym)

    # Pipelined in + out buffers (2 each) plus f32 temporaries (2x tile when the
    # storage dtype is narrower than f32) plus headroom; capped per generation.
    tile_vmem = tile_rows * c_lanes * itemsize
    f32_tmp = tile_rows * c_lanes * 4 * (2 if itemsize < 4 else 1)
    vmem_limit = int(min(max(4 * tile_vmem + f32_tmp + (4 << 20), 32 << 20),
                         limit_cap))

    out = pl.pallas_call(
        kernel,
        out_shape=jax.ShapeDtypeStruct((Rp, C), x.dtype),
        grid_spec=pl.GridSpec(
            grid=(grid,),
            in_specs=[pl.BlockSpec((tile_rows, C), lambda i: (i, 0))],
            out_specs=pl.BlockSpec((tile_rows, C), lambda i: (i, 0)),
        ),
        compiler_params=pltpu.CompilerParams(
            dimension_semantics=("parallel",),   # megacore-shardable on v7x
            vmem_limit_bytes=vmem_limit),
    )(xp)

    if Rp != R:
        out = out[:R]
    return out


def _reference_forward(x, *, bits=8, sym=False):
    """Pure-JAX reference mirroring the kernel semantics. Returns (out, scale)."""
    maxq = -1 if bits == 1.5 else (2 ** int(bits) - 1)
    xf = x.astype(jnp.float32)
    xmin = jnp.minimum(jnp.min(xf, axis=-1, keepdims=True), 0.0)
    xmax = jnp.maximum(jnp.max(xf, axis=-1, keepdims=True), 0.0)
    if sym:
        xmax = jnp.maximum(jnp.abs(xmin), xmax)
        xmin = jnp.where(xmin < 0, -xmax, xmin)
    both_zero = jnp.logical_and(xmin == 0.0, xmax == 0.0)
    xmin = jnp.where(both_zero, -1.0, xmin)
    xmax = jnp.where(both_zero, 1.0, xmax)
    if maxq < 0:
        scale, zero = xmax, xmin
        out = ((xf > scale * 0.5).astype(jnp.float32) * scale
               + (xf < zero * 0.5).astype(jnp.float32) * zero)
        return out.astype(x.dtype), scale
    scale = (xmax - xmin) * (1.0 / float(maxq))
    inv_scale = 1.0 / scale
    zero = (jnp.full_like(scale, (maxq + 1) / 2) if sym
            else jnp.round(-xmin * inv_scale))
    q = jnp.clip(jnp.round(xf * inv_scale) + zero, 0.0, float(maxq))
    return (scale * (q - zero)).astype(x.dtype), scale


def _check(out, ref, step, name):
    """Robust check: nothing off by more than one quantization level, and at
    most a tiny fraction of (0.5-tie) one-level mismatches."""
    diff = jnp.abs(out.astype(jnp.float32) - ref.astype(jnp.float32))
    step_bound = float(jnp.max(step))
    assert float(jnp.max(diff)) <= 1.01 * step_bound + 1e-4, name
    frac_off = float(jnp.mean((diff > 1e-4).astype(jnp.float32)))
    assert frac_off <= 2e-3, name


if __name__ == "__main__":
    key = jax.random.PRNGKey(0)
    k1, k2 = jax.random.split(key)

    # f32, lane-aligned case (8-bit asymmetric).
    x1 = jax.random.normal(k1, (16, 256), dtype=jnp.float32)
    out1 = jax.block_until_ready(qmoe_quantizer_forward(x1, bits=8, sym=False))
    ref1, s1 = _reference_forward(x1, bits=8, sym=False)
    assert out1.shape == x1.shape and out1.dtype == x1.dtype
    _check(out1, ref1, s1, "f32-8bit")

    # bf16 input, non-aligned rows/cols (exercises full-extent-C block, row
    # padding path, f32 internal math), 4-bit symmetric.
    x2 = jax.random.normal(k2, (30, 200), dtype=jnp.float32).astype(jnp.bfloat16)
    out2 = jax.block_until_ready(qmoe_quantizer_forward(x2, bits=4, sym=True))
    ref2, s2 = _reference_forward(x2, bits=4, sym=True)
    assert out2.shape == x2.shape and out2.dtype == x2.dtype
    _check(out2, ref2, s2, "bf16-4bit-sym")

    # Ternary (bits == 1.5) branch.
    out3 = jax.block_until_ready(qmoe_quantizer_forward(x1, bits=1.5))
    ref3, s3 = _reference_forward(x1, bits=1.5)
    _check(out3, ref3, s3, "ternary")

    print("KERNEL_OK")
</pallas_src>

<mosaic_0001>
module attributes {stable_mosaic.version = 11 : i64} {
  func.func @_qmoe_kernel(%arg0: i32, %arg1: memref<16x256xf32, #tpu.memory_space<vmem>>, %arg2: memref<16x256xf32, #tpu.memory_space<vmem>>) attributes {dimension_semantics = [#tpu.dimension_semantics<parallel>], iteration_bounds = array<i64: 1>, scalar_prefetch = 0 : i64, scratch_operands = 0 : i64, tpu.core_type = #tpu.core_type<tc>, window_params = [{transform_indices = @transform_0, window_bounds = array<i64: 16, 256>}, {transform_indices = @transform_1, window_bounds = array<i64: 16, 256>}]} {
    %c0 = arith.constant 0 : index
    %c0_0 = arith.constant 0 : index
    %0 = vector.load %arg1[%c0, %c0_0] : memref<16x256xf32, #tpu.memory_space<vmem>>, vector<16x256xf32>
    %cst = arith.constant dense<0x7F800000> : vector<16xf32>
    %1 = vector.multi_reduction <minimumf>, %0, %cst [1] : vector<16x256xf32> to vector<16xf32>
    %2 = vector.shape_cast %1 : vector<16xf32> to vector<16x1xf32>
    %cst_1 = arith.constant 0.000000e+00 : f32
    %3 = vector.broadcast %cst_1 : f32 to vector<16x1xf32>
    %4 = arith.minimumf %2, %3 : vector<16x1xf32>
    %cst_2 = arith.constant dense<0xFF800000> : vector<16xf32>
    %5 = vector.multi_reduction <maximumf>, %0, %cst_2 [1] : vector<16x256xf32> to vector<16xf32>
    %6 = vector.shape_cast %5 : vector<16xf32> to vector<16x1xf32>
    %cst_3 = arith.constant 0.000000e+00 : f32
    %7 = vector.broadcast %cst_3 : f32 to vector<16x1xf32>
    %8 = arith.maximumf %6, %7 : vector<16x1xf32>
    %cst_4 = arith.constant 0.000000e+00 : f32
    %9 = vector.broadcast %cst_4 : f32 to vector<16x1xf32>
    %10 = arith.cmpf oeq, %4, %9 : vector<16x1xf32>
    %cst_5 = arith.constant 0.000000e+00 : f32
    %11 = vector.broadcast %cst_5 : f32 to vector<16x1xf32>
    %12 = arith.cmpf oeq, %8, %11 : vector<16x1xf32>
    %13 = arith.andi %10, %12 : vector<16x1xi1>
    %cst_6 = arith.constant -1.000000e+00 : f32
    %14 = vector.broadcast %cst_6 : f32 to vector<16x1xf32>
    %15 = arith.select %13, %14, %4 : vector<16x1xi1>, vector<16x1xf32>
    %cst_7 = arith.constant 1.000000e+00 : f32
    %16 = vector.broadcast %cst_7 : f32 to vector<16x1xf32>
    %17 = arith.select %13, %16, %8 : vector<16x1xi1>, vector<16x1xf32>
    %18 = arith.subf %17, %15 : vector<16x1xf32>
    %cst_8 = arith.constant 0.00392156886 : f32
    %19 = vector.broadcast %cst_8 : f32 to vector<16x1xf32>
    %20 = arith.mulf %18, %19 : vector<16x1xf32>
    %21 = tpu.reciprocal %20 : vector<16x1xf32> -> vector<16x1xf32>
    %cst_9 = arith.constant 0.000000e+00 : f32
    %22 = vector.broadcast %cst_9 : f32 to vector<16x1xf32>
    %23 = arith.subf %22, %15 : vector<16x1xf32>
    %24 = arith.mulf %23, %21 : vector<16x1xf32>
    %25 = math.roundeven %24 : vector<16x1xf32>
    %cst_10 = arith.constant 0.000000e+00 : f32
    %26 = vector.broadcast %cst_10 : f32 to vector<16x1xf32>
    %27 = arith.subf %26, %25 : vector<16x1xf32>
    %cst_11 = arith.constant 2.550000e+02 : f32
    %28 = vector.broadcast %cst_11 : f32 to vector<16x1xf32>
    %29 = arith.subf %28, %25 : vector<16x1xf32>
    %30 = vector.broadcast %21 : vector<16x1xf32> to vector<16x256xf32>
    %31 = arith.mulf %0, %30 : vector<16x256xf32>
    %32 = math.roundeven %31 : vector<16x256xf32>
    %33 = vector.broadcast %27 : vector<16x1xf32> to vector<16x256xf32>
    %34 = arith.maximumf %33, %32 : vector<16x256xf32>
    %35 = vector.broadcast %29 : vector<16x1xf32> to vector<16x256xf32>
    %36 = arith.minimumf %35, %34 : vector<16x256xf32>
    %37 = vector.broadcast %20 : vector<16x1xf32> to vector<16x256xf32>
    %38 = arith.mulf %37, %36 : vector<16x256xf32>
    %c0_12 = arith.constant 0 : index
    %c0_13 = arith.constant 0 : index
    %39 = vector.load %arg2[%c0_12, %c0_13] : memref<16x256xf32, #tpu.memory_space<vmem>>, vector<16x256xf32>
    tpu.vector_store %arg2[%c0_12, %c0_13], %38 {strides = array<i32>} : memref<16x256xf32, #tpu.memory_space<vmem>>, vector<16x256xf32>,
    return
  }
  func.func @transform_0(%arg0: i32) -> (i32, i32) {
    %c0_i32 = arith.constant 0 : i32
    %c0_i32_0 = arith.constant 0 : i32
    return %arg0, %c0_i32 : i32, i32
  }
  func.func @transform_1(%arg0: i32) -> (i32, i32) {
    %c0_i32 = arith.constant 0 : i32
    %c0_i32_0 = arith.constant 0 : i32
    return %arg0, %c0_i32 : i32, i32
  }
}

</mosaic_0001>

<llo_original>
// kernel: tpu_custom_call.1
$region0: #{tpu_custom_call.1}
  #allocation0 [shape = 'u32[]', space=smem, size = 0x4, offset = 0x4, fixed_abs, tag = 'smem constant byte address 0x4 - core index']
  #allocation1 [shape = 'u32[144,128]{1,0:T(1,128)}', space=vmem, size = 0x12000, scoped, tag = 'internal scratch']
  %s0 = inlined_call_operand.hbm [shape: f32[16,256], index: 0, kind: input, shape index: {}]
  %s1 = inlined_call_operand.hbm [shape: f32[16,256], index: 1, kind: output, shape index: {}]
  %s2 = sld [smem:[#allocation0]]
  $region18: #{tpu_custom_call.1} parent=0
    _
  %s4 = ssub.s32 1, %s2
  %s5 = scalar_select 0, %s4, %s2
  $region1: #{tpu_custom_call.1} parent=0
    #allocation2 [shape = 'u8[16384]{0}', space=vmem, size = 0x4000, scoped, tag = 'input window, operand 0, single buffered']
    #allocation3 [shape = 's32[1]{0}', space=sflag, size = 0x4, scoped, tag = 'scoped memory for tpu_custom_call.1']
    #allocation4 [shape = 's32[1]{0}', space=sflag, size = 0x4, scoped, tag = 'scoped memory for tpu_custom_call.1']
    #allocation5 [shape = 'u8[16384]{0}', space=vmem, size = 0x4000, scoped, tag = 'output window, operand 0, single buffered']
    %6 = vsyncpa [#allocation3], 0
    %7 = vsyncpa [#allocation4], 0
    // Predicated region
    $region2: #{tpu_custom_call.1} parent=1 // pred_check
      _
    $region3: #{tpu_custom_call.1} parent=1 // pred_check_branch
      %9 = sbr.rel (0) target = $region5
    $region4: #{tpu_custom_call.1} parent=1 // pred_region
      %s11 = ssub.s32 512, 512
      %12 = vsyncadd [#allocation3], %s11
      %s13 = sshll.u32 [#allocation2], 4
      %s14 = int_to_ptr.vmem [resolvable:$true] %s13
      %19 = dma.hbm_to_vmem [thread:$0]  %s0, 512, %s14, [#allocation3], 256, 256, 16
    $region5: #{tpu_custom_call.1} parent=1 // pred_fallthru
      _
    // Predicated region
    $region6: #{tpu_custom_call.1} parent=1 // pred_check
      _
    $region7: #{tpu_custom_call.1} parent=1 // pred_check_branch
      %21 = sbr.rel (0) target = $region9
    $region8: #{tpu_custom_call.1} parent=1 // pred_region
      %22 = dma.done [#allocation3], 512
    $region9: #{tpu_custom_call.1} parent=1 // pred_fallthru
      _
    %v23 = vld [vmem:[#allocation2] sm:$0xff]
    %v24 = vld [vmem:[#allocation2 + $0x8] sm:$0xff]
    %v25 = vld [vmem:[#allocation2 + $0x10] sm:$0xff]
    %v26 = vld [vmem:[#allocation2 + $0x18] sm:$0xff]
    %v27 = vmin.f32 %v23, %v24
    %28 = vmin.xlane.f32.xlu0 %v27
    %v29 = vpop.xlane.xlu0 %28
    %v30 = vmin.f32 %v25, %v26
    %31 = vmin.xlane.f32.xlu0 %v30
    %v32 = vpop.xlane.xlu0 %31
    %v33 = vmin.f32 %v29, 0.0
    %v34 = vmin.f32 %v32, 0.0
    %v35 = vmax.f32 %v23, %v24
    %36 = vmax.xlane.f32.xlu0 %v35
    %v37 = vpop.xlane.xlu0 %36
    %v38 = vmax.f32 %v25, %v26
    %39 = vmax.xlane.f32.xlu0 %v38
    %v40 = vpop.xlane.xlu0 %39
    %v41 = vmax.f32 %v37, 0.0
    %v42 = vmax.f32 %v40, 0.0
    %vm43 = vcmp.eq.f32.partialorder %v33, 0.0
    %vm44 = vcmp.eq.f32.partialorder %v34, 0.0
    %vm45 = vcmp.eq.f32.partialorder %v41, 0.0
    %vm46 = vcmp.eq.f32.partialorder %v42, 0.0
    %vm47 = vmand %vm43, %vm45
    %vm48 = vmand %vm44, %vm46
    %v49 = vsel %vm47, -1.0, %v33
    %v50 = vsel %vm48, -1.0, %v34
    %v51 = vsel %vm47, 1.0, %v41
    %v52 = vsel %vm48, 1.0, %v42
    %v53 = vsub.f32 %v51, %v49
    %v54 = vsub.f32 %v52, %v50
    %v55 = vmul.f32 %v53, 0.003921569
    %v56 = vmul.f32 %v54, 0.003921569
    %v57 = vrcp.pop %v55
    %v58 = vrcp.pop %v56
    %v59 = vsub.f32 0.0, %v49
    %v60 = vsub.f32 0.0, %v50
    %v61 = vmul.f32 %v59, %v57
    %v62 = vmul.f32 %v60, %v58
    %v63 = vround.ne.pseudo %v61
    %v64 = vround.ne.pseudo %v62
    %v65 = vsub.f32 0.0, %v63
    %v66 = vsub.f32 0.0, %v64
    %v67 = vsub.f32 255.0, %v63
    %v68 = vsub.f32 255.0, %v64
    %v69 = vmul.f32 %v23, %v57
    %v70 = vmul.f32 %v24, %v57
    %v71 = vmul.f32 %v25, %v58
    %v72 = vmul.f32 %v26, %v58
    %v73 = vround.ne.pseudo %v69
    %v74 = vround.ne.pseudo %v70
    %v75 = vround.ne.pseudo %v71
    %v76 = vround.ne.pseudo %v72
    %v77 = vmax.f32 %v65, %v73
    %v78 = vmax.f32 %v65, %v74
    %v79 = vmax.f32 %v66, %v75
    %v80 = vmax.f32 %v66, %v76
    %v81 = vmin.f32 %v67, %v77
    %v82 = vmin.f32 %v67, %v78
    %v83 = vmin.f32 %v68, %v79
    %v84 = vmin.f32 %v68, %v80
    %v85 = vmul.f32 %v55, %v81
    %v86 = vmul.f32 %v55, %v82
    %v87 = vmul.f32 %v56, %v83
    %v88 = vmul.f32 %v56, %v84
    %89 = vst [vmem:[#allocation5] sm:$0xff] %v85
    %90 = vst [vmem:[#allocation5 + $0x8] sm:$0xff] %v86
    %91 = vst [vmem:[#allocation5 + $0x10] sm:$0xff] %v87
    %92 = vst [vmem:[#allocation5 + $0x18] sm:$0xff] %v88
    // Predicated region
    $region10: #{tpu_custom_call.1} parent=1 // pred_check
      _
    $region11: #{tpu_custom_call.1} parent=1 // pred_check_branch
      %94 = sbr.rel (0) target = $region13
    $region12: #{tpu_custom_call.1} parent=1 // pred_region
      %s96 = ssub.s32 512, 512
      %97 = vsyncadd [#allocation4], %s96
      %s98 = sshll.u32 [#allocation5], 4
      %s99 = int_to_ptr.vmem [resolvable:$true] %s98
      %104 = dma.vmem_to_hbm [thread:$0]  %s99, 512, %s1, [#allocation4], 256, 256, 16
    $region13: #{tpu_custom_call.1} parent=1 // pred_fallthru
      _
    // Predicated region
    $region14: #{tpu_custom_call.1} parent=1 // pred_check
      _
    $region15: #{tpu_custom_call.1} parent=1 // pred_check_branch
      %106 = sbr.rel (0) target = $region17
    $region16: #{tpu_custom_call.1} parent=1 // pred_region
      %107 = dma.done [#allocation4], 512
    $region17: #{tpu_custom_call.1} parent=1 // pred_fallthru
      _
    %108 = vsyncpa [#allocation3], 1
    %109 = vsyncpa [#allocation4], 1

</llo_original>
